<compile_context>
chip_gen: v7x
topology: tpu7x:2x2x1
jax: 0.10.0
libtpu: 0.0.40
codegen_flags: <defaults>
</compile_context>

<pallas_src>
import functools
import math

import jax
import jax.numpy as jnp
from jax.experimental import pallas as pl
from jax.experimental.pallas import tpu as pltpu


def _reprogramming_kernel(ts_ref, ksum_ref, v_ref, wo_ref, bo_ref, out_ref,
                          *, H, E, scale):
    # Time-series column for this block of series: (M, 1) with M = TB*T.
    q = ts_ref[...]
    q = jnp.where(jnp.isnan(q), 0.0, q)                # torch.where(nan_mask, 0, ts)

    rep_parts = []
    for h in range(H):                                 # H is small & static -> unrolled
        # Rank-1 scores: scores[m, s] = q[m] * sum_e K[s, h, e]  (softmax scale
        # folded into the (1, S) row, not the (M, S) matrix).
        k_h = scale * ksum_ref[pl.ds(h, 1), :]         # (1, S)
        s = q * k_h                                    # (M, S) VPU outer product
        s_max = jnp.max(s, axis=-1, keepdims=True)
        e = jnp.exp(s - s_max)
        a = e / jnp.sum(e, axis=-1, keepdims=True)     # softmax over S
        v_h = v_ref[:, pl.ds(h * E, E)]                # (S, E) head slice of flat V
        rep_parts.append(jnp.dot(a, v_h, preferred_element_type=jnp.float32))  # (M, E)

    rep = jnp.concatenate(rep_parts, axis=-1)          # (M, H*E), head-major features
    proj = jnp.dot(rep, wo_ref[...],
                   preferred_element_type=jnp.float32) + bo_ref[...]  # (M, d_llm)

    # Temporal mask.  Reference: max_h any_s (scores != 0)
    #   == (q != 0) * any(k_sum != 0);  the second factor is folded into Wo/bo
    # by the wrapper, so only the per-series compare remains here.
    mask = (q != 0.0).astype(jnp.float32)              # (M, 1)
    out_ref[...] = proj * mask


def reprogramming_layer(time_series, source_embedding, value_embedding,
                        params, *, n_heads, d_keys, block_series=64):
    B, T, N = time_series.shape
    S, d_llm = source_embedding.shape
    H, E = n_heads, d_keys
    BN = B * N

    # ---- glue + hoisted shared compute (plain XLA) ------------------------
    # (B, T, N) -> (B, N, T) -> (B*N, T)
    ts = jnp.transpose(time_series, (0, 2, 1)).reshape(BN, T)

    # Shared K / V linear projections hoisted out of the kernel.
    k_flat = (source_embedding @ params["wk"].T + params["bk"]).astype(jnp.float32)  # (S, H*E)
    v_flat = (value_embedding @ params["wv"].T + params["bv"]).astype(jnp.float32)   # (S, H*E)

    # Rank-1 Q structure => only the per-head key sums are needed for scores.
    k_sum = jnp.transpose(k_flat.reshape(S, H, E).sum(axis=-1))   # (H, S)

    # Fold the data-independent "any(k_sum != 0)" mask factor (0.0 or 1.0,
    # so exact) into the output projection weights / bias.
    k_any = jnp.any(k_sum != 0.0).astype(jnp.float32)
    wo_t = params["wo"].T.astype(jnp.float32) * k_any             # (H*E, d_llm)
    bo = params["bo"].reshape(1, d_llm).astype(jnp.float32) * k_any

    # ---- series blocking ---------------------------------------------------
    TB = max(1, min(block_series, BN))
    while (TB * T) % 8 != 0:            # sublane alignment of the (TB*T, .) blocks
        TB += 1
    G = pl.cdiv(BN, TB)
    BN_pad = G * TB
    if BN_pad > BN:                     # zero-padded series: q==0 -> mask==0 -> out==0
        ts = jnp.concatenate([ts, jnp.zeros((BN_pad - BN, T), ts.dtype)], axis=0)
    ts_col = ts.reshape(BN_pad * T, 1)  # flat (series*time, 1) column
    M = TB * T

    # ---- VMEM budget (resident blocks + live temporaries, with headroom) ---
    def rnd(x, m):
        return -(-x // m) * m
    est = 4 * (
        2 * M * 128                                    # ts column block (lane-padded) x2
        + 2 * M * rnd(d_llm, 128)                      # output block x2
        + 2 * (rnd(H, 8) * rnd(S, 128)                 # k_sum
               + rnd(S, 8) * rnd(H * E, 128)           # V (flat)
               + rnd(H * E, 8) * rnd(d_llm, 128)       # Wo^T
               + 8 * rnd(d_llm, 128))                  # bo
        + M * (H * rnd(S, 128) + rnd(H * E, 128) + 2 * rnd(d_llm, 128))  # temporaries
    )
    vmem_limit = int(min(max(2 * est, 4 << 20), 32 << 20))  # re-derive for prod shapes

    kernel = functools.partial(_reprogramming_kernel,
                               H=H, E=E, scale=1.0 / math.sqrt(E))

    out = pl.pallas_call(
        kernel,
        out_shape=jax.ShapeDtypeStruct((BN_pad * T, d_llm), jnp.float32),
        grid_spec=pltpu.PrefetchScalarGridSpec(
            num_scalar_prefetch=0,
            grid=(G,),
            in_specs=[
                pl.BlockSpec((M, 1), lambda i: (i, 0)),          # time-series column
                pl.BlockSpec((H, S), lambda i: (0, 0)),          # k_sum (head-summed keys)
                pl.BlockSpec((S, H * E), lambda i: (0, 0)),      # V flat, lane-dense
                pl.BlockSpec((H * E, d_llm), lambda i: (0, 0)),  # Wo^T (k_any folded)
                pl.BlockSpec((1, d_llm), lambda i: (0, 0)),      # bo   (k_any folded)
            ],
            out_specs=pl.BlockSpec((M, d_llm), lambda i: (i, 0)),
        ),
        compiler_params=pltpu.CompilerParams(
            # No cross-step scratch state -> safe to shard across v7x's 2 TCs.
            dimension_semantics=("parallel",),
            vmem_limit_bytes=vmem_limit),
    )(ts_col, k_sum, v_flat, wo_t, bo)

    return out[:BN * T].reshape(BN, T, d_llm)


def reference(time_series, source_embedding, value_embedding, params, *, n_heads, d_keys):
    """Plain-JAX transcription of the PyTorch forward (eval mode)."""
    B, T, N = time_series.shape
    S, d_llm = source_embedding.shape
    H, E = n_heads, d_keys
    x = jnp.transpose(time_series, (0, 2, 1)).reshape(B * N, T)
    rep = jnp.repeat(x[..., None], H * E, axis=-1)
    Q = jnp.where(jnp.isnan(rep), 0.0, rep).reshape(B * N, T, H, E)
    K = (source_embedding @ params["wk"].T + params["bk"]).reshape(S, H, E)
    V = (value_embedding @ params["wv"].T + params["bv"]).reshape(S, H, E)
    scores = jnp.einsum('bthe,she->bhts', Q, K)
    am = (scores != 0.0).astype(jnp.float32)
    temporal = (jnp.sum(am, axis=-1) != 0.0).astype(jnp.float32)
    mask = jnp.max(temporal, axis=1)                              # (B*N, T)
    A = jax.nn.softmax(scores / math.sqrt(E), axis=-1)
    out = jnp.einsum('bhts,she->bthe', A, V).reshape(B * N, T, H * E)
    out = out @ params["wo"].T + params["bo"]
    return out * mask[..., None]


if __name__ == "__main__":
    # Small deterministic configuration.
    B, T, N = 2, 8, 4
    d_model, n_heads = 32, 4
    d_keys = d_model // n_heads          # 8
    d_llm, S = 32, 16
    H, E = n_heads, d_keys

    key = jax.random.PRNGKey(0)
    k_ts, k_src, k_val, k1, k2, k3, k4, k5, k6 = jax.random.split(key, 9)

    time_series = jax.random.normal(k_ts, (B, T, N), jnp.float32)
    # inject NaNs to exercise the nan-mask path
    time_series = time_series.at[0, 2, 1].set(jnp.nan)
    time_series = time_series.at[1, 5, 3].set(jnp.nan)

    source_embedding = jax.random.normal(k_src, (S, d_llm), jnp.float32)
    value_embedding = jax.random.normal(k_val, (S, d_llm), jnp.float32)

    # nn.Linear-style deterministic init (uniform(-1/sqrt(fan_in), 1/sqrt(fan_in)))
    bkv = 1.0 / math.sqrt(d_llm)
    bo_ = 1.0 / math.sqrt(H * E)
    params = {
        "wk": jax.random.uniform(k1, (H * E, d_llm), jnp.float32, -bkv, bkv),
        "bk": jax.random.uniform(k2, (H * E,), jnp.float32, -bkv, bkv),
        "wv": jax.random.uniform(k3, (H * E, d_llm), jnp.float32, -bkv, bkv),
        "bv": jax.random.uniform(k4, (H * E,), jnp.float32, -bkv, bkv),
        "wo": jax.random.uniform(k5, (d_llm, H * E), jnp.float32, -bo_, bo_),
        "bo": jax.random.uniform(k6, (d_llm,), jnp.float32, -bo_, bo_),
    }

    ref = reference(time_series, source_embedding, value_embedding,
                    params, n_heads=n_heads, d_keys=d_keys)

    # Exercise both the multi-block (grid > 1, with series padding) and the
    # single-block paths.
    out_multi = reprogramming_layer(time_series, source_embedding, value_embedding,
                                    params, n_heads=n_heads, d_keys=d_keys,
                                    block_series=3)
    out_single = reprogramming_layer(time_series, source_embedding, value_embedding,
                                     params, n_heads=n_heads, d_keys=d_keys)
    out_multi = jax.block_until_ready(out_multi)
    out_single = jax.block_until_ready(out_single)

    for out in (out_multi, out_single):
        assert out.shape == (B * N, T, d_llm), out.shape
        assert not jnp.isnan(out).any(), "unexpected NaNs in kernel output"
        assert jnp.allclose(out, ref, atol=1e-4, rtol=1e-4), \
            f"max abs diff {jnp.max(jnp.abs(out - ref))}"

    print("KERNEL_OK")
</pallas_src>

<mosaic_0001>
module attributes {stable_mosaic.version = 11 : i64} {
  func.func @_reprogramming_kernel(%arg0: i32, %arg1: memref<24x1xf32, #tpu.memory_space<vmem>>, %arg2: memref<4x16xf32, #tpu.memory_space<vmem>>, %arg3: memref<16x32xf32, #tpu.memory_space<vmem>>, %arg4: memref<32x32xf32, #tpu.memory_space<vmem>>, %arg5: memref<1x32xf32, #tpu.memory_space<vmem>>, %arg6: memref<24x32xf32, #tpu.memory_space<vmem>>) attributes {dimension_semantics = [#tpu.dimension_semantics<parallel>], iteration_bounds = array<i64: 3>, scalar_prefetch = 0 : i64, scratch_operands = 0 : i64, tpu.core_type = #tpu.core_type<tc>, window_params = [{transform_indices = @transform_0, window_bounds = array<i64: 24, 1>}, {pipeline_mode = #tpu.pipeline_mode<synchronous>, transform_indices = @transform_1, window_bounds = array<i64: 4, 16>}, {pipeline_mode = #tpu.pipeline_mode<synchronous>, transform_indices = @transform_2, window_bounds = array<i64: 16, 32>}, {pipeline_mode = #tpu.pipeline_mode<synchronous>, transform_indices = @transform_3, window_bounds = array<i64: 32, 32>}, {pipeline_mode = #tpu.pipeline_mode<synchronous>, transform_indices = @transform_4, window_bounds = array<i64: 1, 32>}, {transform_indices = @transform_5, window_bounds = array<i64: 24, 32>}]} {
    %c0 = arith.constant 0 : index
    %c0_0 = arith.constant 0 : index
    %0 = vector.load %arg1[%c0, %c0_0] : memref<24x1xf32, #tpu.memory_space<vmem>>, vector<24x1xf32>
    %1 = arith.cmpf one, %0, %0 : vector<24x1xf32>
    %cst = arith.constant 0.000000e+00 : f32
    %2 = vector.broadcast %cst : f32 to vector<24x1xf32>
    %3 = arith.select %1, %2, %0 : vector<24x1xi1>, vector<24x1xf32>
    %c0_1 = arith.constant 0 : index
    %c0_2 = arith.constant 0 : index
    %4 = vector.load %arg2[%c0_1, %c0_2] : memref<4x16xf32, #tpu.memory_space<vmem>>, vector<1x16xf32>
    %cst_3 = arith.constant 0.353553385 : f32
    %5 = vector.broadcast %cst_3 : f32 to vector<1x16xf32>
    %6 = arith.mulf %5, %4 : vector<1x16xf32>
    %7 = vector.broadcast %3 : vector<24x1xf32> to vector<24x16xf32>
    %8 = vector.broadcast %6 : vector<1x16xf32> to vector<24x16xf32>
    %9 = arith.mulf %7, %8 : vector<24x16xf32>
    %cst_4 = arith.constant dense<0xFF800000> : vector<24xf32>
    %10 = vector.multi_reduction <maximumf>, %9, %cst_4 [1] : vector<24x16xf32> to vector<24xf32>
    %11 = vector.shape_cast %10 : vector<24xf32> to vector<24x1xf32>
    %12 = vector.broadcast %11 : vector<24x1xf32> to vector<24x16xf32>
    %13 = arith.subf %9, %12 : vector<24x16xf32>
    %14 = math.exp %13 : vector<24x16xf32>
    %cst_5 = arith.constant dense<0.000000e+00> : vector<24xf32>
    %15 = vector.multi_reduction <add>, %14, %cst_5 [1] : vector<24x16xf32> to vector<24xf32>
    %16 = vector.shape_cast %15 : vector<24xf32> to vector<24x1xf32>
    %17 = vector.broadcast %16 : vector<24x1xf32> to vector<24x16xf32>
    %18 = arith.divf %14, %17 : vector<24x16xf32>
    %c0_6 = arith.constant 0 : index
    %c0_7 = arith.constant 0 : index
    %19 = vector.load %arg3[%c0_6, %c0_7] : memref<16x32xf32, #tpu.memory_space<vmem>>, vector<16x8xf32>
    %cst_8 = arith.constant dense<0.000000e+00> : vector<24x8xf32>
    %20 = tpu.matmul %18, %19, %cst_8 {dimension_numbers = #tpu.dot_dimension_numbers<[1], [0], [0], [1], [0, 0, 1, 1], [], []>} : vector<24x16xf32>, vector<16x8xf32>, vector<24x8xf32> -> vector<24x8xf32>
    %c1 = arith.constant 1 : index
    %c0_9 = arith.constant 0 : index
    %21 = vector.load %arg2[%c1, %c0_9] : memref<4x16xf32, #tpu.memory_space<vmem>>, vector<1x16xf32>
    %cst_10 = arith.constant 0.353553385 : f32
    %22 = vector.broadcast %cst_10 : f32 to vector<1x16xf32>
    %23 = arith.mulf %22, %21 : vector<1x16xf32>
    %24 = vector.broadcast %3 : vector<24x1xf32> to vector<24x16xf32>
    %25 = vector.broadcast %23 : vector<1x16xf32> to vector<24x16xf32>
    %26 = arith.mulf %24, %25 : vector<24x16xf32>
    %cst_11 = arith.constant dense<0xFF800000> : vector<24xf32>
    %27 = vector.multi_reduction <maximumf>, %26, %cst_11 [1] : vector<24x16xf32> to vector<24xf32>
    %28 = vector.shape_cast %27 : vector<24xf32> to vector<24x1xf32>
    %29 = vector.broadcast %28 : vector<24x1xf32> to vector<24x16xf32>
    %30 = arith.subf %26, %29 : vector<24x16xf32>
    %31 = math.exp %30 : vector<24x16xf32>
    %cst_12 = arith.constant dense<0.000000e+00> : vector<24xf32>
    %32 = vector.multi_reduction <add>, %31, %cst_12 [1] : vector<24x16xf32> to vector<24xf32>
    %33 = vector.shape_cast %32 : vector<24xf32> to vector<24x1xf32>
    %34 = vector.broadcast %33 : vector<24x1xf32> to vector<24x16xf32>
    %35 = arith.divf %31, %34 : vector<24x16xf32>
    %c0_13 = arith.constant 0 : index
    %c8 = arith.constant 8 : index
    %36 = vector.load %arg3[%c0_13, %c8] : memref<16x32xf32, #tpu.memory_space<vmem>>, vector<16x8xf32>
    %cst_14 = arith.constant dense<0.000000e+00> : vector<24x8xf32>
    %37 = tpu.matmul %35, %36, %cst_14 {dimension_numbers = #tpu.dot_dimension_numbers<[1], [0], [0], [1], [0, 0, 1, 1], [], []>} : vector<24x16xf32>, vector<16x8xf32>, vector<24x8xf32> -> vector<24x8xf32>
    %c2 = arith.constant 2 : index
    %c0_15 = arith.constant 0 : index
    %38 = vector.load %arg2[%c2, %c0_15] : memref<4x16xf32, #tpu.memory_space<vmem>>, vector<1x16xf32>
    %cst_16 = arith.constant 0.353553385 : f32
    %39 = vector.broadcast %cst_16 : f32 to vector<1x16xf32>
    %40 = arith.mulf %39, %38 : vector<1x16xf32>
    %41 = vector.broadcast %3 : vector<24x1xf32> to vector<24x16xf32>
    %42 = vector.broadcast %40 : vector<1x16xf32> to vector<24x16xf32>
    %43 = arith.mulf %41, %42 : vector<24x16xf32>
    %cst_17 = arith.constant dense<0xFF800000> : vector<24xf32>
    %44 = vector.multi_reduction <maximumf>, %43, %cst_17 [1] : vector<24x16xf32> to vector<24xf32>
    %45 = vector.shape_cast %44 : vector<24xf32> to vector<24x1xf32>
    %46 = vector.broadcast %45 : vector<24x1xf32> to vector<24x16xf32>
    %47 = arith.subf %43, %46 : vector<24x16xf32>
    %48 = math.exp %47 : vector<24x16xf32>
    %cst_18 = arith.constant dense<0.000000e+00> : vector<24xf32>
    %49 = vector.multi_reduction <add>, %48, %cst_18 [1] : vector<24x16xf32> to vector<24xf32>
    %50 = vector.shape_cast %49 : vector<24xf32> to vector<24x1xf32>
    %51 = vector.broadcast %50 : vector<24x1xf32> to vector<24x16xf32>
    %52 = arith.divf %48, %51 : vector<24x16xf32>
    %c0_19 = arith.constant 0 : index
    %c16 = arith.constant 16 : index
    %53 = vector.load %arg3[%c0_19, %c16] : memref<16x32xf32, #tpu.memory_space<vmem>>, vector<16x8xf32>
    %cst_20 = arith.constant dense<0.000000e+00> : vector<24x8xf32>
    %54 = tpu.matmul %52, %53, %cst_20 {dimension_numbers = #tpu.dot_dimension_numbers<[1], [0], [0], [1], [0, 0, 1, 1], [], []>} : vector<24x16xf32>, vector<16x8xf32>, vector<24x8xf32> -> vector<24x8xf32>
    %c3 = arith.constant 3 : index
    %c0_21 = arith.constant 0 : index
    %55 = vector.load %arg2[%c3, %c0_21] : memref<4x16xf32, #tpu.memory_space<vmem>>, vector<1x16xf32>
    %cst_22 = arith.constant 0.353553385 : f32
    %56 = vector.broadcast %cst_22 : f32 to vector<1x16xf32>
    %57 = arith.mulf %56, %55 : vector<1x16xf32>
    %58 = vector.broadcast %3 : vector<24x1xf32> to vector<24x16xf32>
    %59 = vector.broadcast %57 : vector<1x16xf32> to vector<24x16xf32>
    %60 = arith.mulf %58, %59 : vector<24x16xf32>
    %cst_23 = arith.constant dense<0xFF800000> : vector<24xf32>
    %61 = vector.multi_reduction <maximumf>, %60, %cst_23 [1] : vector<24x16xf32> to vector<24xf32>
    %62 = vector.shape_cast %61 : vector<24xf32> to vector<24x1xf32>
    %63 = vector.broadcast %62 : vector<24x1xf32> to vector<24x16xf32>
    %64 = arith.subf %60, %63 : vector<24x16xf32>
    %65 = math.exp %64 : vector<24x16xf32>
    %cst_24 = arith.constant dense<0.000000e+00> : vector<24xf32>
    %66 = vector.multi_reduction <add>, %65, %cst_24 [1] : vector<24x16xf32> to vector<24xf32>
    %67 = vector.shape_cast %66 : vector<24xf32> to vector<24x1xf32>
    %68 = vector.broadcast %67 : vector<24x1xf32> to vector<24x16xf32>
    %69 = arith.divf %65, %68 : vector<24x16xf32>
    %c0_25 = arith.constant 0 : index
    %c24 = arith.constant 24 : index
    %70 = vector.load %arg3[%c0_25, %c24] : memref<16x32xf32, #tpu.memory_space<vmem>>, vector<16x8xf32>
    %cst_26 = arith.constant dense<0.000000e+00> : vector<24x8xf32>
    %71 = tpu.matmul %69, %70, %cst_26 {dimension_numbers = #tpu.dot_dimension_numbers<[1], [0], [0], [1], [0, 0, 1, 1], [], []>} : vector<24x16xf32>, vector<16x8xf32>, vector<24x8xf32> -> vector<24x8xf32>
    %72 = tpu.concatenate %20, %37, %54, %71 in 1 : vector<24x8xf32>, vector<24x8xf32>, vector<24x8xf32>, vector<24x8xf32> -> vector<24x32xf32>
    %c0_27 = arith.constant 0 : index
    %c0_28 = arith.constant 0 : index
    %73 = vector.load %arg4[%c0_27, %c0_28] : memref<32x32xf32, #tpu.memory_space<vmem>>, vector<32x32xf32>
    %cst_29 = arith.constant dense<0.000000e+00> : vector<24x32xf32>
    %74 = tpu.matmul %72, %73, %cst_29 {dimension_numbers = #tpu.dot_dimension_numbers<[1], [0], [0], [1], [0, 0, 1, 1], [], []>} : vector<24x32xf32>, vector<32x32xf32>, vector<24x32xf32> -> vector<24x32xf32>
    %c0_30 = arith.constant 0 : index
    %c0_31 = arith.constant 0 : index
    %75 = vector.load %arg5[%c0_30, %c0_31] : memref<1x32xf32, #tpu.memory_space<vmem>>, vector<1x32xf32>
    %76 = vector.broadcast %75 : vector<1x32xf32> to vector<24x32xf32>
    %77 = arith.addf %74, %76 : vector<24x32xf32>
    %cst_32 = arith.constant 0.000000e+00 : f32
    %78 = vector.broadcast %cst_32 : f32 to vector<24x1xf32>
    %79 = arith.cmpf one, %3, %78 : vector<24x1xf32>
    %80 = arith.extui %79 : vector<24x1xi1> to vector<24x1xi32>
    %81 = arith.sitofp %80 : vector<24x1xi32> to vector<24x1xf32>
    %82 = vector.broadcast %81 : vector<24x1xf32> to vector<24x32xf32>
    %83 = arith.mulf %77, %82 : vector<24x32xf32>
    %c0_33 = arith.constant 0 : index
    %c0_34 = arith.constant 0 : index
    %84 = vector.load %arg6[%c0_33, %c0_34] : memref<24x32xf32, #tpu.memory_space<vmem>>, vector<24x32xf32>
    tpu.vector_store %arg6[%c0_33, %c0_34], %83 {strides = array<i32>} : memref<24x32xf32, #tpu.memory_space<vmem>>, vector<24x32xf32>,
    return
  }
  func.func @transform_0(%arg0: i32) -> (i32, i32) {
    %c0_i32 = arith.constant 0 : i32
    %c0_i32_0 = arith.constant 0 : i32
    return %arg0, %c0_i32 : i32, i32
  }
  func.func @transform_1(%arg0: i32) -> (i32, i32) {
    %c0_i32 = arith.constant 0 : i32
    %c0_i32_0 = arith.constant 0 : i32
    %c0_i32_1 = arith.constant 0 : i32
    return %c0_i32, %c0_i32_0 : i32, i32
  }
  func.func @transform_2(%arg0: i32) -> (i32, i32) {
    %c0_i32 = arith.constant 0 : i32
    %c0_i32_0 = arith.constant 0 : i32
    %c0_i32_1 = arith.constant 0 : i32
    return %c0_i32, %c0_i32_0 : i32, i32
  }
  func.func @transform_3(%arg0: i32) -> (i32, i32) {
    %c0_i32 = arith.constant 0 : i32
    %c0_i32_0 = arith.constant 0 : i32
    %c0_i32_1 = arith.constant 0 : i32
    return %c0_i32, %c0_i32_0 : i32, i32
  }
  func.func @transform_4(%arg0: i32) -> (i32, i32) {
    %c0_i32 = arith.constant 0 : i32
    %c0_i32_0 = arith.constant 0 : i32
    %c0_i32_1 = arith.constant 0 : i32
    return %c0_i32, %c0_i32_0 : i32, i32
  }
  func.func @transform_5(%arg0: i32) -> (i32, i32) {
    %c0_i32 = arith.constant 0 : i32
    %c0_i32_0 = arith.constant 0 : i32
    return %arg0, %c0_i32 : i32, i32
  }
}

</mosaic_0001>

<llo_original>
// kernel: tpu_custom_call.1
$region0: #{tpu_custom_call.1}
  #allocation0 [shape = 'u32[]', space=smem, size = 0x4, offset = 0x4, fixed_abs, tag = 'smem constant byte address 0x4 - core index']
  #allocation1 [shape = 'u32[144,128]{1,0:T(1,128)}', space=vmem, size = 0x12000, scoped, tag = 'internal scratch']
  %s0 = inlined_call_operand.vmem [shape: f32[72,1], index: 0, kind: input, shape index: {}]
  %s1 = inlined_call_operand.vmem [shape: f32[4,16], index: 1, kind: input, shape index: {}]
  %s2 = inlined_call_operand.vmem [shape: f32[16,32], index: 2, kind: input, shape index: {}]
  %s3 = inlined_call_operand.vmem [shape: f32[32,32], index: 3, kind: input, shape index: {}]
  %s4 = inlined_call_operand.vmem [shape: f32[1,32], index: 4, kind: input, shape index: {}]
  %s5 = inlined_call_operand.vmem [shape: f32[72,32], index: 5, kind: output, shape index: {}]
  %s6 = sld [smem:[#allocation0]]
  $region53: #{tpu_custom_call.1} parent=0
    _
  %s8 = ssub.s32 1, %s6
  %s9 = scalar_select 0, %s8, %s6
  loop: start=0, step=1, limit=5
  $region2: #{tpu_custom_call.1} parent=0 // loop_pre_header
    _
  $region3: #{tpu_custom_call.1} parent=0 // loop_header
    %s11 = sphi 0, %s15
    %p12 = scmp.ge.s32.totalorder %s11, 5
    %s21 = sphi 0, %s23
    %s24 = sphi 0, %s21
    %s25 = sphi 0, %s24
    %s41 = sphi 0, %s25
    %s45 = sphi 0, %s45
    %s47 = sphi 0, %s45
    %s48 = sphi 0, %s47
    %s62 = sphi 0, %s48
    %s66 = sphi 0, %s66
    %s68 = sphi 0, %s66
    %s69 = sphi 0, %s68
    %s83 = sphi 0, %s69
    %s87 = sphi 0, %s87
    %s89 = sphi 0, %s87
    %s90 = sphi 0, %s89
    %s104 = sphi 0, %s90
    %s108 = sphi 0, %s108
    %s110 = sphi 0, %s108
    %s111 = sphi 0, %s110
    %s125 = sphi 0, %s111
    %s131 = sphi 0, %s133
    %s134 = sphi 0, %s131
    %s135 = sphi 0, %s134
    %s151 = sphi 0, %s135
  $region4: #{tpu_custom_call.1} parent=0 // loop_header_branch
    %14 = sbr.rel (%p12) target = $region8
  $region5: #{tpu_custom_call.1} parent=0 // loop_body
    %s16 = ssub.s32 %s11, 1
    %s17 = ssub.s32 %s11, 2
    %s18 = sadd.s32 %s11, 1
    %s19 = ssub.s32 %s11, %s18
    %p20 = scmp.eq.s32.totalorder %s19, 0
    %s22 = sadd.s32 %s21, 1
    %s23 = scalar_select %p20, %s21, %s22
    %p26 = pneg %p20
    %p27 = scmp.eq.s32.totalorder %s11, 2
    %p28 = por %p26, %p27
    %p29 = scmp.ne.s32.totalorder %s21, %s24
    %p30 = scmp.eq.s32.totalorder %s11, 0
    %p31 = por %p29, %p30
    %p32 = scmp.ne.s32.totalorder %s21, %s24
    %p33 = scmp.eq.s32.totalorder %s16, 2
    %p34 = por %p32, %p33
    %p35 = scmp.ne.s32.totalorder %s24, %s25
    %p36 = scmp.eq.s32.totalorder %s16, 0
    %p37 = por %p35, %p36
    %p38 = scmp.ne.s32.totalorder %s24, %s25
    %p39 = scmp.eq.s32.totalorder %s17, 2
    %p40 = por %p38, %p39
    %p42 = scmp.ne.s32.totalorder %s25, %s41
    %p43 = scmp.eq.s32.totalorder %s17, 0
    %p44 = por %p42, %p43
    %s46 = sadd.s32 %s45, 1
    %p49 = scmp.eq.s32.totalorder %s11, 2
    %p50 = scmp.ne.s32.totalorder %s45, %s47
    %p51 = scmp.eq.s32.totalorder %s11, 0
    %p52 = por %p50, %p51
    %p53 = scmp.ne.s32.totalorder %s45, %s47
    %p54 = scmp.eq.s32.totalorder %s16, 2
    %p55 = por %p53, %p54
    %p56 = scmp.ne.s32.totalorder %s47, %s48
    %p57 = scmp.eq.s32.totalorder %s16, 0
    %p58 = por %p56, %p57
    %p59 = scmp.ne.s32.totalorder %s47, %s48
    %p60 = scmp.eq.s32.totalorder %s17, 2
    %p61 = por %p59, %p60
    %p63 = scmp.ne.s32.totalorder %s48, %s62
    %p64 = scmp.eq.s32.totalorder %s17, 0
    %p65 = por %p63, %p64
    %s67 = sadd.s32 %s66, 1
    %p70 = scmp.eq.s32.totalorder %s11, 2
    %p71 = scmp.ne.s32.totalorder %s66, %s68
    %p72 = scmp.eq.s32.totalorder %s11, 0
    %p73 = por %p71, %p72
    %p74 = scmp.ne.s32.totalorder %s66, %s68
    %p75 = scmp.eq.s32.totalorder %s16, 2
    %p76 = por %p74, %p75
    %p77 = scmp.ne.s32.totalorder %s68, %s69
    %p78 = scmp.eq.s32.totalorder %s16, 0
    %p79 = por %p77, %p78
    %p80 = scmp.ne.s32.totalorder %s68, %s69
    %p81 = scmp.eq.s32.totalorder %s17, 2
    %p82 = por %p80, %p81
    %p84 = scmp.ne.s32.totalorder %s69, %s83
    %p85 = scmp.eq.s32.totalorder %s17, 0
    %p86 = por %p84, %p85
    %s88 = sadd.s32 %s87, 1
    %p91 = scmp.eq.s32.totalorder %s11, 2
    %p92 = scmp.ne.s32.totalorder %s87, %s89
    %p93 = scmp.eq.s32.totalorder %s11, 0
    %p94 = por %p92, %p93
    %p95 = scmp.ne.s32.totalorder %s87, %s89
    %p96 = scmp.eq.s32.totalorder %s16, 2
    %p97 = por %p95, %p96
    %p98 = scmp.ne.s32.totalorder %s89, %s90
    %p99 = scmp.eq.s32.totalorder %s16, 0
    %p100 = por %p98, %p99
    %p101 = scmp.ne.s32.totalorder %s89, %s90
    %p102 = scmp.eq.s32.totalorder %s17, 2
    %p103 = por %p101, %p102
    %p105 = scmp.ne.s32.totalorder %s90, %s104
    %p106 = scmp.eq.s32.totalorder %s17, 0
    %p107 = por %p105, %p106
    %s109 = sadd.s32 %s108, 1
    %p112 = scmp.eq.s32.totalorder %s11, 2
    %p113 = scmp.ne.s32.totalorder %s108, %s110
    %p114 = scmp.eq.s32.totalorder %s11, 0
    %p115 = por %p113, %p114
    %p116 = scmp.ne.s32.totalorder %s108, %s110
    %p117 = scmp.eq.s32.totalorder %s16, 2
    %p118 = por %p116, %p117
    %p119 = scmp.ne.s32.totalorder %s110, %s111
    %p120 = scmp.eq.s32.totalorder %s16, 0
    %p121 = por %p119, %p120
    %p122 = scmp.ne.s32.totalorder %s110, %s111
    %p123 = scmp.eq.s32.totalorder %s17, 2
    %p124 = por %p122, %p123
    %p126 = scmp.ne.s32.totalorder %s111, %s125
    %p127 = scmp.eq.s32.totalorder %s17, 0
    %p128 = por %p126, %p127
    %s129 = ssub.s32 %s11, %s18
    %p130 = scmp.eq.s32.totalorder %s129, 0
    %s132 = sadd.s32 %s131, 1
    %s133 = scalar_select %p130, %s131, %s132
    %p136 = pneg %p130
    %p137 = scmp.eq.s32.totalorder %s11, 2
    %p138 = por %p136, %p137
    %p139 = scmp.ne.s32.totalorder %s131, %s134
    %p140 = scmp.eq.s32.totalorder %s11, 0
    %p141 = por %p139, %p140
    %p142 = scmp.ne.s32.totalorder %s131, %s134
    %p143 = scmp.eq.s32.totalorder %s16, 2
    %p144 = por %p142, %p143
    %p145 = scmp.ne.s32.totalorder %s134, %s135
    %p146 = scmp.eq.s32.totalorder %s16, 0
    %p147 = por %p145, %p146
    %p148 = scmp.ne.s32.totalorder %s134, %s135
    %p149 = scmp.eq.s32.totalorder %s17, 2
    %p150 = por %p148, %p149
    %p152 = scmp.ne.s32.totalorder %s135, %s151
    %p153 = scmp.eq.s32.totalorder %s17, 0
    %p154 = por %p152, %p153
    %p155 = scmp.le.s32.totalorder 1, %s11
    %p156 = scmp.lt.s32.totalorder %s11, 4
    %p157 = pnand %p155, %p156
    %p158 = pneg %p157
    // Predicated region
    $region9: #{tpu_custom_call.1} parent=5 // pred_check
      _
    $region10: #{tpu_custom_call.1} parent=5 // pred_check_branch
      %160 = sbr.rel (%p157) target = $region12
    $region11: #{tpu_custom_call.1} parent=5 // pred_region
      %s161 = ssub.s32 %s11, 1
      // Predicated region
      $region13: #{tpu_custom_call.1} parent=11 // pred_check
        %p162 = pneg %p58
      $region14: #{tpu_custom_call.1} parent=11 // pred_check_branch
        %164 = sbr.rel (%p162) target = $region16
      $region15: #{tpu_custom_call.1} parent=11 // pred_region
        _
      $region16: #{tpu_custom_call.1} parent=11 // pred_fallthru
        _
      // Predicated region
      $region17: #{tpu_custom_call.1} parent=11 // pred_check
        %p165 = pneg %p79
      $region18: #{tpu_custom_call.1} parent=11 // pred_check_branch
        %167 = sbr.rel (%p165) target = $region20
      $region19: #{tpu_custom_call.1} parent=11 // pred_region
        _
      $region20: #{tpu_custom_call.1} parent=11 // pred_fallthru
        _
      // Predicated region
      $region21: #{tpu_custom_call.1} parent=11 // pred_check
        %p168 = pneg %p100
      $region22: #{tpu_custom_call.1} parent=11 // pred_check_branch
        %170 = sbr.rel (%p168) target = $region24
      $region23: #{tpu_custom_call.1} parent=11 // pred_region
        _
      $region24: #{tpu_custom_call.1} parent=11 // pred_fallthru
        _
      // Predicated region
      $region25: #{tpu_custom_call.1} parent=11 // pred_check
        %p171 = pneg %p121
      $region26: #{tpu_custom_call.1} parent=11 // pred_check_branch
        %173 = sbr.rel (%p171) target = $region28
      $region27: #{tpu_custom_call.1} parent=11 // pred_region
        _
      $region28: #{tpu_custom_call.1} parent=11 // pred_fallthru
        _
    $region12: #{tpu_custom_call.1} parent=5 // pred_fallthru
      _
    %p174 = scmp.lt.s32.totalorder %s11, 3
    // Predicated region
    $region29: #{tpu_custom_call.1} parent=5 // pred_check
      %p175 = pneg %p174
    $region30: #{tpu_custom_call.1} parent=5 // pred_check_branch
      %177 = sbr.rel (%p175) target = $region32
    $region31: #{tpu_custom_call.1} parent=5 // pred_region
      // Predicated region
      $region33: #{tpu_custom_call.1} parent=31 // pred_check
        %p178 = pneg %p31
      $region34: #{tpu_custom_call.1} parent=31 // pred_check_branch
        %180 = sbr.rel (%p178) target = $region36
      $region35: #{tpu_custom_call.1} parent=31 // pred_region
        %s181 = smul.u32 3, %s11
        %p182 = scmp.lt.s32.totalorder %s181, 8
        %s183 = scalar_select %p182, %s181, 8
        %s184 = smul.addr %s183, 8
        %s185 = scalar_lea.vmem %s0, %s184
        %s186 = smul.u32 3, %s11
      $region36: #{tpu_custom_call.1} parent=31 // pred_fallthru
        _
    $region32: #{tpu_custom_call.1} parent=5 // pred_fallthru
      _
    %p187 = scmp.le.s32.totalorder 1, %s11
    %p188 = scmp.lt.s32.totalorder %s11, 4
    %p189 = pnand %p187, %p188
    %p190 = pneg %p189
    // Predicated region
    $region37: #{tpu_custom_call.1} parent=5 // pred_check
      _
    $region38: #{tpu_custom_call.1} parent=5 // pred_check_branch
      %192 = sbr.rel (%p189) target = $region40
    $region39: #{tpu_custom_call.1} parent=5 // pred_region
      %s193 = ssub.s32 %s11, 1
      %s194 = smul.u32 3, %s16
      %p195 = scmp.lt.s32.totalorder %s194, 8
      %s196 = scalar_select %p195, %s194, 8
      %s197 = smul.addr %s196, 8
      %s198 = scalar_lea.vmem %s0, %s197
      %p199 = pneg %p37
      %p200 = pneg %p34
      %p201 = pneg %p58
      %p202 = pneg %p55
      %p203 = pneg %p79
      %p204 = pneg %p76
      %p205 = pneg %p100
      %p206 = pneg %p97
      %p207 = pneg %p121
      %p208 = pneg %p118
      %p209 = pneg %p147
      %p210 = pneg %p144
      %s211 = smul.u32 3, %s16
      %p212 = scmp.lt.s32.totalorder %s211, 8
      %s213 = scalar_select %p212, %s211, 8
      %s214 = smul.addr %s213, 8
      %s215 = scalar_lea.vmem %s5, %s214
      %s216 = smul.u32 3, %s16
      %p217 = scmp.lt.s32.totalorder %s216, 8
      %s218 = scalar_select %p217, %s216, 8
      %s219 = smul.addr %s218, 8
      %s220 = scalar_lea.vmem %s0, %s219
      %s221 = smul.u32 3, %s16
      %s222 = smul.u32 3, %s16
      %p223 = scmp.lt.s32.totalorder %s222, 8
      %s224 = scalar_select %p223, %s222, 8
      %s225 = smul.addr %s224, 8
      %s226 = scalar_lea.vmem %s5, %s225
      %s227 = smul.u32 3, %s16
      %v228 = vld [vmem:[%s220] sm:$0xff]
      %v229 = vld [vmem:[%s220 + $0x8] sm:$0xff]
      %v230 = vld [vmem:[%s220 + $0x10] sm:$0xff]
      %vm231 = vcmp.ne.f32.partialorder %v228, %v228
      %vm232 = vcmp.ne.f32.partialorder %v229, %v229
      %vm233 = vcmp.ne.f32.partialorder %v230, %v230
      %v234 = vsel %vm231, 0.0, %v228
      %v235 = vsel %vm232, 0.0, %v229
      %v236 = vsel %vm233, 0.0, %v230
      %v237 = vld [vmem:[%s1] sm:$0x1]
      %v238 = vmul.f32 %v237, 0.35355338
      %240 = vset.pattern.permute.xlu0 0
      %241 = vperm.xlu0 %240, %v234
      %v242 = vpop.permute.xlu0 %241
      %245 = vset.pattern.permute.xlu0 0
      %246 = vperm.xlu0 %245, %v235
      %v247 = vpop.permute.xlu0 %246
      %250 = vset.pattern.permute.xlu0 0
      %251 = vperm.xlu0 %250, %v236
      %v252 = vpop.permute.xlu0 %251
      %v254 = vlaneseq
      %v255 = vshrl.u32 %v254, 7
      %v256 = vsub.s32 0, %v255
      %v257 = vrot.slane %v238, %v256
      %v258 = vmul.f32 %v242, %v257
      %v259 = vmul.f32 %v247, %v257
      %v260 = vmul.f32 %v252, %v257
      %vm261 = vcmask 130048
      %v262 = vsel %vm261, %v258, -inf
      %263 = vmax.xlane.f32.xlu0 %v262
      %v264 = vpop.xlane.xlu0 %263
      %v265 = vsel %vm261, %v259, -inf
      %266 = vmax.xlane.f32.xlu0 %v265
      %v267 = vpop.xlane.xlu0 %266
      %v268 = vsel %vm261, %v260, -inf
      %269 = vmax.xlane.f32.xlu0 %v268
      %v270 = vpop.xlane.xlu0 %269
      %v271 = vsub.f32 %v258, %v264
      %v272 = vsub.f32 %v259, %v267
      %v273 = vsub.f32 %v260, %v270
      %v274 = vmul.f32 %v271, 1.442695
      %v275 = vpow.pop %v274
      %v276 = vmul.f32 %v272, 1.442695
      %v277 = vpow.pop %v276
      %v278 = vmul.f32 %v273, 1.442695
      %v279 = vpow.pop %v278
      %v280 = vsel %vm261, %v275, 0.0
      %281 = vadd.xlane.f32.xlu0 %v280
      %v282 = vpop.xlane.xlu0 %281
      %v283 = vsel %vm261, %v277, 0.0
      %284 = vadd.xlane.f32.xlu0 %v283
      %v285 = vpop.xlane.xlu0 %284
      %v286 = vsel %vm261, %v279, 0.0
      %287 = vadd.xlane.f32.xlu0 %v286
      %v288 = vpop.xlane.xlu0 %287
      %v289 = vrcp.pop %v282
      %v290 = vmul.f32 %v275, %v289
      %v291 = vrcp.pop %v285
      %v292 = vmul.f32 %v277, %v291
      %v293 = vrcp.pop %v288
      %v294 = vmul.f32 %v279, %v293
      %v295 = vld [vmem:[%s2] sm:$0xff]
      %v296 = vld [vmem:[%s2 + $0x8] sm:$0xff]
      %v298 = vsel %vm261, %v290, 0
      %v301 = vsel %vm261, %v292, 0
      %v304 = vsel %vm261, %v294, 0
      %306 = vmatprep.subr.mxu0 0.0
      %307 = vmatpush1.msra.mxu0 %v295
      %308 = vmatprep.subr.mxu0 0.0
      %309 = vmatpush1.msra.mxu0 %v296
      %310 = vmatprep.subr.mxu0 0.0
      %311 = vmatpush1.msra.mxu0 0.0
      %312 = vmatprep.subr.mxu0 0.0
      %313 = vmatpush1.msra.mxu0 0.0
      %314 = vmatprep.subr.mxu0 0.0
      %315 = vmatpush1.msra.mxu0 0.0
      %316 = vmatprep.subr.mxu0 0.0
      %317 = vmatpush1.msra.mxu0 0.0
      %318 = vmatprep.subr.mxu0 0.0
      %319 = vmatpush1.msra.mxu0 0.0
      %320 = vmatprep.subr.mxu0 0.0
      %321 = vmatpush1.msra.mxu0 0.0
      %322 = vmatprep.subr.mxu0 0.0
      %323 = vmatpush1.msra.mxu0 0.0
      %324 = vmatprep.subr.mxu0 0.0
      %325 = vmatpush1.msra.mxu0 0.0
      %326 = vmatprep.subr.mxu0 0.0
      %327 = vmatpush1.msra.mxu0 0.0
      %328 = vmatprep.subr.mxu0 0.0
      %329 = vmatpush1.msra.mxu0 0.0
      %330 = vmatprep.subr.mxu0 0.0
      %331 = vmatpush1.msra.mxu0 0.0
      %332 = vmatprep.subr.mxu0 0.0
      %333 = vmatpush1.msra.mxu0 0.0
      %334 = vmatprep.subr.mxu0 0.0
      %335 = vmatpush1.msra.mxu0 0.0
      %336 = vmatprep.subr.mxu0 0.0
      %337 = vmatpush1.msra.mxu0 0.0
      %338 = vmatprep.subr.mxu0 0.0
      %339 = vmatpush1.msra.mxu0 0.0
      %340 = vmatprep.subr.mxu0 0.0
      %341 = vmatpush1.msra.mxu0 0.0
      %342 = vmatprep.subr.mxu0 0.0
      %343 = vmatpush1.msra.mxu0 0.0
      %344 = vmatprep.subr.mxu0 0.0
      %345 = vmatpush1.msra.mxu0 0.0
      %346 = vmatprep.subr.mxu0 0.0
      %347 = vmatpush1.msra.mxu0 0.0
      %348 = vmatprep.subr.mxu0 0.0
      %349 = vmatpush1.msra.mxu0 0.0
      %350 = vmatprep.subr.mxu0 0.0
      %351 = vmatpush1.msra.mxu0 0.0
      %352 = vmatprep.subr.mxu0 0.0
      %353 = vmatpush1.msra.mxu0 0.0
      %354 = vmatprep.subr.mxu0 0.0
      %355 = vmatpush1.msra.mxu0 0.0
      %356 = vmatprep.subr.mxu0 0.0
      %357 = vmatpush1.msra.mxu0 0.0
      %358 = vmatprep.subr.mxu0 0.0
      %359 = vmatpush1.msra.mxu0 0.0
      %360 = vmatprep.subr.mxu0 0.0
      %361 = vmatpush1.msra.mxu0 0.0
      %362 = vmatprep.subr.mxu0 0.0
      %363 = vmatpush1.msra.mxu0 0.0
      %364 = vmatprep.subr.mxu0 0.0
      %365 = vmatpush1.msra.mxu0 0.0
      %366 = vmatprep.subr.mxu0 0.0
      %367 = vmatpush1.msra.mxu0 0.0
      %368 = vmatprep.subr.mxu0 0.0
      %369 = vmatpush1.msra.mxu0 0.0
      %370 = vmatprep.mubr.f32.mxu0 0.0
      %371 = vmatmul.mubr.f32.gmra.mrb[0].mxu0 %v298
      %v372 = vpop.f32.mrb[0].mxu0
      %v373 = vadd.f32 0.0, %v372
      %v374 = vpop.f32.mrb[0].mxu0
      %375 = vmatprep.mubr.f32.mxu0 0.0
      %376 = vmatmul.mubr.f32.gmra.mrb[0].mxu0 %v301
      %v377 = vpop.f32.mrb[0].mxu0
      %v378 = vadd.f32 0.0, %v377
      %v379 = vpop.f32.mrb[0].mxu0
      %380 = vmatprep.mubr.f32.mxu0 0.0
      %381 = vmatmul.mubr.f32.gmra.mrb[0].mxu0 %v304
      %v382 = vpop.f32.mrb[0].mxu0
      %v383 = vadd.f32 0.0, %v382
      %v384 = vpop.f32.mrb[0].mxu0
      %385 = vdwg.mxu0
      %v386 = vld [vmem:[%s1 + $0x1] sm:$0x1]
      %v387 = vmul.f32 %v386, 0.35355338
      %v388 = vlaneseq
      %v389 = vshrl.u32 %v388, 7
      %v390 = vsub.s32 0, %v389
      %v391 = vrot.slane %v387, %v390
      %v392 = vmul.f32 %v242, %v391
      %v393 = vmul.f32 %v247, %v391
      %v394 = vmul.f32 %v252, %v391
      %v395 = vsel %vm261, %v392, -inf
      %396 = vmax.xlane.f32.xlu0 %v395
      %v397 = vpop.xlane.xlu0 %396
      %v398 = vsel %vm261, %v393, -inf
      %399 = vmax.xlane.f32.xlu0 %v398
      %v400 = vpop.xlane.xlu0 %399
      %v401 = vsel %vm261, %v394, -inf
      %402 = vmax.xlane.f32.xlu0 %v401
      %v403 = vpop.xlane.xlu0 %402
      %v404 = vsub.f32 %v392, %v397
      %v405 = vsub.f32 %v393, %v400
      %v406 = vsub.f32 %v394, %v403
      %v407 = vmul.f32 %v404, 1.442695
      %v408 = vpow.pop %v407
      %v409 = vmul.f32 %v405, 1.442695
      %v410 = vpow.pop %v409
      %v411 = vmul.f32 %v406, 1.442695
      %v412 = vpow.pop %v411
      %v413 = vsel %vm261, %v408, 0.0
      %414 = vadd.xlane.f32.xlu0 %v413
      %v415 = vpop.xlane.xlu0 %414
      %v416 = vsel %vm261, %v410, 0.0
      %417 = vadd.xlane.f32.xlu0 %v416
      %v418 = vpop.xlane.xlu0 %417
      %v419 = vsel %vm261, %v412, 0.0
      %420 = vadd.xlane.f32.xlu0 %v419
      %v421 = vpop.xlane.xlu0 %420
      %v422 = vrcp.pop %v415
      %v423 = vmul.f32 %v408, %v422
      %v424 = vrcp.pop %v418
      %v425 = vmul.f32 %v410, %v424
      %v426 = vrcp.pop %v421
      %v427 = vmul.f32 %v412, %v426
      %430 = vrot.lane.b32.xlu0 %v295, 120
      %v431 = vpop.permute.xlu0 %430
      %432 = vrot.lane.b32.xlu0 %v296, 120
      %v433 = vpop.permute.xlu0 %432
      %v437 = vsel %vm261, %v423, 0
      %v440 = vsel %vm261, %v425, 0
      %v443 = vsel %vm261, %v427, 0
      %445 = vmatprep.subr.mxu0 0.0
      %446 = vmatpush1.msra.mxu0 %v431
      %447 = vmatprep.subr.mxu0 0.0
      %448 = vmatpush1.msra.mxu0 %v433
      %449 = vmatprep.subr.mxu0 0.0
      %450 = vmatpush1.msra.mxu0 0.0
      %451 = vmatprep.subr.mxu0 0.0
      %452 = vmatpush1.msra.mxu0 0.0
      %453 = vmatprep.subr.mxu0 0.0
      %454 = vmatpush1.msra.mxu0 0.0
      %455 = vmatprep.subr.mxu0 0.0
      %456 = vmatpush1.msra.mxu0 0.0
      %457 = vmatprep.subr.mxu0 0.0
      %458 = vmatpush1.msra.mxu0 0.0
      %459 = vmatprep.subr.mxu0 0.0
      %460 = vmatpush1.msra.mxu0 0.0
      %461 = vmatprep.subr.mxu0 0.0
      %462 = vmatpush1.msra.mxu0 0.0
      %463 = vmatprep.subr.mxu0 0.0
      %464 = vmatpush1.msra.mxu0 0.0
      %465 = vmatprep.subr.mxu0 0.0
      %466 = vmatpush1.msra.mxu0 0.0
      %467 = vmatprep.subr.mxu0 0.0
      %468 = vmatpush1.msra.mxu0 0.0
      %469 = vmatprep.subr.mxu0 0.0
      %470 = vmatpush1.msra.mxu0 0.0
      %471 = vmatprep.subr.mxu0 0.0
      %472 = vmatpush1.msra.mxu0 0.0
      %473 = vmatprep.subr.mxu0 0.0
      %474 = vmatpush1.msra.mxu0 0.0
      %475 = vmatprep.subr.mxu0 0.0
      %476 = vmatpush1.msra.mxu0 0.0
      %477 = vmatprep.subr.mxu0 0.0
      %478 = vmatpush1.msra.mxu0 0.0
      %479 = vmatprep.subr.mxu0 0.0
      %480 = vmatpush1.msra.mxu0 0.0
      %481 = vmatprep.subr.mxu0 0.0
      %482 = vmatpush1.msra.mxu0 0.0
      %483 = vmatprep.subr.mxu0 0.0
      %484 = vmatpush1.msra.mxu0 0.0
      %485 = vmatprep.subr.mxu0 0.0
      %486 = vmatpush1.msra.mxu0 0.0
      %487 = vmatprep.subr.mxu0 0.0
      %488 = vmatpush1.msra.mxu0 0.0
      %489 = vmatprep.subr.mxu0 0.0
      %490 = vmatpush1.msra.mxu0 0.0
      %491 = vmatprep.subr.mxu0 0.0
      %492 = vmatpush1.msra.mxu0 0.0
      %493 = vmatprep.subr.mxu0 0.0
      %494 = vmatpush1.msra.mxu0 0.0
      %495 = vmatprep.subr.mxu0 0.0
      %496 = vmatpush1.msra.mxu0 0.0
      %497 = vmatprep.subr.mxu0 0.0
      %498 = vmatpush1.msra.mxu0 0.0
      %499 = vmatprep.subr.mxu0 0.0
      %500 = vmatpush1.msra.mxu0 0.0
      %501 = vmatprep.subr.mxu0 0.0
      %502 = vmatpush1.msra.mxu0 0.0
      %503 = vmatprep.subr.mxu0 0.0
      %504 = vmatpush1.msra.mxu0 0.0
      %505 = vmatprep.subr.mxu0 0.0
      %506 = vmatpush1.msra.mxu0 0.0
      %507 = vmatprep.subr.mxu0 0.0
      %508 = vmatpush1.msra.mxu0 0.0
      %509 = vmatprep.mubr.f32.mxu0 0.0
      %510 = vmatmul.mubr.f32.gmra.mrb[0].mxu0 %v437
      %v511 = vpop.f32.mrb[0].mxu0
      %v512 = vadd.f32 0.0, %v511
      %v513 = vpop.f32.mrb[0].mxu0
      %514 = vmatprep.mubr.f32.mxu0 0.0
      %515 = vmatmul.mubr.f32.gmra.mrb[0].mxu0 %v440
      %v516 = vpop.f32.mrb[0].mxu0
      %v517 = vadd.f32 0.0, %v516
      %v518 = vpop.f32.mrb[0].mxu0
      %519 = vmatprep.mubr.f32.mxu0 0.0
      %520 = vmatmul.mubr.f32.gmra.mrb[0].mxu0 %v443
      %v521 = vpop.f32.mrb[0].mxu0
      %v522 = vadd.f32 0.0, %v521
      %v523 = vpop.f32.mrb[0].mxu0
      %524 = vdwg.mxu0
      %v525 = vld [vmem:[%s1 + $0x2] sm:$0x1]
      %v526 = vmul.f32 %v525, 0.35355338
      %v527 = vlaneseq
      %v528 = vshrl.u32 %v527, 7
      %v529 = vsub.s32 0, %v528
      %v530 = vrot.slane %v526, %v529
      %v531 = vmul.f32 %v242, %v530
      %v532 = vmul.f32 %v247, %v530
      %v533 = vmul.f32 %v252, %v530
      %v534 = vsel %vm261, %v531, -inf
      %535 = vmax.xlane.f32.xlu0 %v534
      %v536 = vpop.xlane.xlu0 %535
      %v537 = vsel %vm261, %v532, -inf
      %538 = vmax.xlane.f32.xlu0 %v537
      %v539 = vpop.xlane.xlu0 %538
      %v540 = vsel %vm261, %v533, -inf
      %541 = vmax.xlane.f32.xlu0 %v540
      %v542 = vpop.xlane.xlu0 %541
      %v543 = vsub.f32 %v531, %v536
      %v544 = vsub.f32 %v532, %v539
      %v545 = vsub.f32 %v533, %v542
      %v546 = vmul.f32 %v543, 1.442695
      %v547 = vpow.pop %v546
      %v548 = vmul.f32 %v544, 1.442695
      %v549 = vpow.pop %v548
      %v550 = vmul.f32 %v545, 1.442695
      %v551 = vpow.pop %v550
      %v552 = vsel %vm261, %v547, 0.0
      %553 = vadd.xlane.f32.xlu0 %v552
      %v554 = vpop.xlane.xlu0 %553
      %v555 = vsel %vm261, %v549, 0.0
      %556 = vadd.xlane.f32.xlu0 %v555
      %v557 = vpop.xlane.xlu0 %556
      %v558 = vsel %vm261, %v551, 0.0
      %559 = vadd.xlane.f32.xlu0 %v558
      %v560 = vpop.xlane.xlu0 %559
      %v561 = vrcp.pop %v554
      %v562 = vmul.f32 %v547, %v561
      %v563 = vrcp.pop %v557
      %v564 = vmul.f32 %v549, %v563
      %v565 = vrcp.pop %v560
      %v566 = vmul.f32 %v551, %v565
      %567 = vrot.lane.b32.xlu0 %v295, 112
      %v568 = vpop.permute.xlu0 %567
      %569 = vrot.lane.b32.xlu0 %v296, 112
      %v570 = vpop.permute.xlu0 %569
      %v574 = vsel %vm261, %v562, 0
      %v577 = vsel %vm261, %v564, 0
      %v580 = vsel %vm261, %v566, 0
      %582 = vmatprep.subr.mxu0 0.0
      %583 = vmatpush1.msra.mxu0 %v568
      %584 = vmatprep.subr.mxu0 0.0
      %585 = vmatpush1.msra.mxu0 %v570
      %586 = vmatprep.subr.mxu0 0.0
      %587 = vmatpush1.msra.mxu0 0.0
      %588 = vmatprep.subr.mxu0 0.0
      %589 = vmatpush1.msra.mxu0 0.0
      %590 = vmatprep.subr.mxu0 0.0
      %591 = vmatpush1.msra.mxu0 0.0
      %592 = vmatprep.subr.mxu0 0.0
      %593 = vmatpush1.msra.mxu0 0.0
      %594 = vmatprep.subr.mxu0 0.0
      %595 = vmatpush1.msra.mxu0 0.0
      %596 = vmatprep.subr.mxu0 0.0
      %597 = vmatpush1.msra.mxu0 0.0
      %598 = vmatprep.subr.mxu0 0.0
      %599 = vmatpush1.msra.mxu0 0.0
      %600 = vmatprep.subr.mxu0 0.0
      %601 = vmatpush1.msra.mxu0 0.0
      %602 = vmatprep.subr.mxu0 0.0
      %603 = vmatpush1.msra.mxu0 0.0
      %604 = vmatprep.subr.mxu0 0.0
      %605 = vmatpush1.msra.mxu0 0.0
      %606 = vmatprep.subr.mxu0 0.0
      %607 = vmatpush1.msra.mxu0 0.0
      %608 = vmatprep.subr.mxu0 0.0
      %609 = vmatpush1.msra.mxu0 0.0
      %610 = vmatprep.subr.mxu0 0.0
      %611 = vmatpush1.msra.mxu0 0.0
      %612 = vmatprep.subr.mxu0 0.0
      %613 = vmatpush1.msra.mxu0 0.0
      %614 = vmatprep.subr.mxu0 0.0
      %615 = vmatpush1.msra.mxu0 0.0
      %616 = vmatprep.subr.mxu0 0.0
      %617 = vmatpush1.msra.mxu0 0.0
      %618 = vmatprep.subr.mxu0 0.0
      %619 = vmatpush1.msra.mxu0 0.0
      %620 = vmatprep.subr.mxu0 0.0
      %621 = vmatpush1.msra.mxu0 0.0
      %622 = vmatprep.subr.mxu0 0.0
      %623 = vmatpush1.msra.mxu0 0.0
      %624 = vmatprep.subr.mxu0 0.0
      %625 = vmatpush1.msra.mxu0 0.0
      %626 = vmatprep.subr.mxu0 0.0
      %627 = vmatpush1.msra.mxu0 0.0
      %628 = vmatprep.subr.mxu0 0.0
      %629 = vmatpush1.msra.mxu0 0.0
      %630 = vmatprep.subr.mxu0 0.0
      %631 = vmatpush1.msra.mxu0 0.0
      %632 = vmatprep.subr.mxu0 0.0
      %633 = vmatpush1.msra.mxu0 0.0
      %634 = vmatprep.subr.mxu0 0.0
      %635 = vmatpush1.msra.mxu0 0.0
      %636 = vmatprep.subr.mxu0 0.0
      %637 = vmatpush1.msra.mxu0 0.0
      %638 = vmatprep.subr.mxu0 0.0
      %639 = vmatpush1.msra.mxu0 0.0
      %640 = vmatprep.subr.mxu0 0.0
      %641 = vmatpush1.msra.mxu0 0.0
      %642 = vmatprep.subr.mxu0 0.0
      %643 = vmatpush1.msra.mxu0 0.0
      %644 = vmatprep.subr.mxu0 0.0
      %645 = vmatpush1.msra.mxu0 0.0
      %646 = vmatprep.mubr.f32.mxu0 0.0
      %647 = vmatmul.mubr.f32.gmra.mrb[0].mxu0 %v574
      %v648 = vpop.f32.mrb[0].mxu0
      %v649 = vadd.f32 0.0, %v648
      %v650 = vpop.f32.mrb[0].mxu0
      %651 = vmatprep.mubr.f32.mxu0 0.0
      %652 = vmatmul.mubr.f32.gmra.mrb[0].mxu0 %v577
      %v653 = vpop.f32.mrb[0].mxu0
      %v654 = vadd.f32 0.0, %v653
      %v655 = vpop.f32.mrb[0].mxu0
      %656 = vmatprep.mubr.f32.mxu0 0.0
      %657 = vmatmul.mubr.f32.gmra.mrb[0].mxu0 %v580
      %v658 = vpop.f32.mrb[0].mxu0
      %v659 = vadd.f32 0.0, %v658
      %v660 = vpop.f32.mrb[0].mxu0
      %661 = vdwg.mxu0
      %v662 = vld [vmem:[%s1 + $0x3] sm:$0x1]
      %v663 = vmul.f32 %v662, 0.35355338
      %v664 = vlaneseq
      %v665 = vshrl.u32 %v664, 7
      %v666 = vsub.s32 0, %v665
      %v667 = vrot.slane %v663, %v666
      %v668 = vmul.f32 %v242, %v667
      %v669 = vmul.f32 %v247, %v667
      %v670 = vmul.f32 %v252, %v667
      %v671 = vsel %vm261, %v668, -inf
      %672 = vmax.xlane.f32.xlu0 %v671
      %v673 = vpop.xlane.xlu0 %672
      %v674 = vsel %vm261, %v669, -inf
      %675 = vmax.xlane.f32.xlu0 %v674
      %v676 = vpop.xlane.xlu0 %675
      %v677 = vsel %vm261, %v670, -inf
      %678 = vmax.xlane.f32.xlu0 %v677
      %v679 = vpop.xlane.xlu0 %678
      %v680 = vsub.f32 %v668, %v673
      %v681 = vsub.f32 %v669, %v676
      %v682 = vsub.f32 %v670, %v679
      %v683 = vmul.f32 %v680, 1.442695
      %v684 = vpow.pop %v683
      %v685 = vmul.f32 %v681, 1.442695
      %v686 = vpow.pop %v685
      %v687 = vmul.f32 %v682, 1.442695
      %v688 = vpow.pop %v687
      %v689 = vsel %vm261, %v684, 0.0
      %690 = vadd.xlane.f32.xlu0 %v689
      %v691 = vpop.xlane.xlu0 %690
      %v692 = vsel %vm261, %v686, 0.0
      %693 = vadd.xlane.f32.xlu0 %v692
      %v694 = vpop.xlane.xlu0 %693
      %v695 = vsel %vm261, %v688, 0.0
      %696 = vadd.xlane.f32.xlu0 %v695
      %v697 = vpop.xlane.xlu0 %696
      %v698 = vrcp.pop %v691
      %v699 = vmul.f32 %v684, %v698
      %v700 = vrcp.pop %v694
      %v701 = vmul.f32 %v686, %v700
      %v702 = vrcp.pop %v697
      %v703 = vmul.f32 %v688, %v702
      %704 = vrot.lane.b32.xlu0 %v295, 104
      %v705 = vpop.permute.xlu0 %704
      %706 = vrot.lane.b32.xlu0 %v296, 104
      %v707 = vpop.permute.xlu0 %706
      %v711 = vsel %vm261, %v699, 0
      %v714 = vsel %vm261, %v701, 0
      %v717 = vsel %vm261, %v703, 0
      %719 = vmatprep.subr.mxu0 0.0
      %720 = vmatpush1.msra.mxu0 %v705
      %721 = vmatprep.subr.mxu0 0.0
      %722 = vmatpush1.msra.mxu0 %v707
      %723 = vmatprep.subr.mxu0 0.0
      %724 = vmatpush1.msra.mxu0 0.0
      %725 = vmatprep.subr.mxu0 0.0
      %726 = vmatpush1.msra.mxu0 0.0
      %727 = vmatprep.subr.mxu0 0.0
      %728 = vmatpush1.msra.mxu0 0.0
      %729 = vmatprep.subr.mxu0 0.0
      %730 = vmatpush1.msra.mxu0 0.0
      %731 = vmatprep.subr.mxu0 0.0
      %732 = vmatpush1.msra.mxu0 0.0
      %733 = vmatprep.subr.mxu0 0.0
      %734 = vmatpush1.msra.mxu0 0.0
      %735 = vmatprep.subr.mxu0 0.0
      %736 = vmatpush1.msra.mxu0 0.0
      %737 = vmatprep.subr.mxu0 0.0
      %738 = vmatpush1.msra.mxu0 0.0
      %739 = vmatprep.subr.mxu0 0.0
      %740 = vmatpush1.msra.mxu0 0.0
      %741 = vmatprep.subr.mxu0 0.0
      %742 = vmatpush1.msra.mxu0 0.0
      %743 = vmatprep.subr.mxu0 0.0
      %744 = vmatpush1.msra.mxu0 0.0
      %745 = vmatprep.subr.mxu0 0.0
      %746 = vmatpush1.msra.mxu0 0.0
      %747 = vmatprep.subr.mxu0 0.0
      %748 = vmatpush1.msra.mxu0 0.0
      %749 = vmatprep.subr.mxu0 0.0
      %750 = vmatpush1.msra.mxu0 0.0
      %751 = vmatprep.subr.mxu0 0.0
      %752 = vmatpush1.msra.mxu0 0.0
      %753 = vmatprep.subr.mxu0 0.0
      %754 = vmatpush1.msra.mxu0 0.0
      %755 = vmatprep.subr.mxu0 0.0
      %756 = vmatpush1.msra.mxu0 0.0
      %757 = vmatprep.subr.mxu0 0.0
      %758 = vmatpush1.msra.mxu0 0.0
      %759 = vmatprep.subr.mxu0 0.0
      %760 = vmatpush1.msra.mxu0 0.0
      %761 = vmatprep.subr.mxu0 0.0
      %762 = vmatpush1.msra.mxu0 0.0
      %763 = vmatprep.subr.mxu0 0.0
      %764 = vmatpush1.msra.mxu0 0.0
      %765 = vmatprep.subr.mxu0 0.0
      %766 = vmatpush1.msra.mxu0 0.0
      %767 = vmatprep.subr.mxu0 0.0
      %768 = vmatpush1.msra.mxu0 0.0
      %769 = vmatprep.subr.mxu0 0.0
      %770 = vmatpush1.msra.mxu0 0.0
      %771 = vmatprep.subr.mxu0 0.0
      %772 = vmatpush1.msra.mxu0 0.0
      %773 = vmatprep.subr.mxu0 0.0
      %774 = vmatpush1.msra.mxu0 0.0
      %775 = vmatprep.subr.mxu0 0.0
      %776 = vmatpush1.msra.mxu0 0.0
      %777 = vmatprep.subr.mxu0 0.0
      %778 = vmatpush1.msra.mxu0 0.0
      %779 = vmatprep.subr.mxu0 0.0
      %780 = vmatpush1.msra.mxu0 0.0
      %781 = vmatprep.subr.mxu0 0.0
      %782 = vmatpush1.msra.mxu0 0.0
      %783 = vmatprep.mubr.f32.mxu0 0.0
      %784 = vmatmul.mubr.f32.gmra.mrb[0].mxu0 %v711
      %v785 = vpop.f32.mrb[0].mxu0
      %v786 = vadd.f32 0.0, %v785
      %v787 = vpop.f32.mrb[0].mxu0
      %788 = vmatprep.mubr.f32.mxu0 0.0
      %789 = vmatmul.mubr.f32.gmra.mrb[0].mxu0 %v714
      %v790 = vpop.f32.mrb[0].mxu0
      %v791 = vadd.f32 0.0, %v790
      %v792 = vpop.f32.mrb[0].mxu0
      %793 = vmatprep.mubr.f32.mxu0 0.0
      %794 = vmatmul.mubr.f32.gmra.mrb[0].mxu0 %v717
      %v795 = vpop.f32.mrb[0].mxu0
      %v796 = vadd.f32 0.0, %v795
      %v797 = vpop.f32.mrb[0].mxu0
      %798 = vdwg.mxu0
      %802 = vrot.lane.b32.xlu0 %v512, 8
      %v803 = vpop.permute.xlu0 %802
      %804 = vrot.lane.b32.xlu0 %v517, 8
      %v805 = vpop.permute.xlu0 %804
      %806 = vrot.lane.b32.xlu0 %v522, 8
      %v807 = vpop.permute.xlu0 %806
      %814 = vrot.lane.b32.xlu0 %v649, 16
      %v815 = vpop.permute.xlu0 %814
      %816 = vrot.lane.b32.xlu0 %v654, 16
      %v817 = vpop.permute.xlu0 %816
      %818 = vrot.lane.b32.xlu0 %v659, 16
      %v819 = vpop.permute.xlu0 %818
      %826 = vrot.lane.b32.xlu0 %v786, 24
      %v827 = vpop.permute.xlu0 %826
      %828 = vrot.lane.b32.xlu0 %v791, 24
      %v829 = vpop.permute.xlu0 %828
      %830 = vrot.lane.b32.xlu0 %v796, 24
      %v831 = vpop.permute.xlu0 %830
      %vm835 = vcmask 64512
      %v836 = vsel %vm835, %v373, %v803
      %v837 = vsel %vm835, %v378, %v805
      %v838 = vsel %vm835, %v383, %v807
      %v839 = vsel %vm261, %v836, %v815
      %v840 = vsel %vm261, %v837, %v817
      %v841 = vsel %vm261, %v838, %v819
      %vm842 = vcmask 195584
      %v843 = vsel %vm842, %v839, %v827
      %v844 = vsel %vm842, %v840, %v829
      %v845 = vsel %vm842, %v841, %v831
      %v846 = vld [vmem:[%s3] sm:$0xff]
      %v847 = vld [vmem:[%s3 + $0x8] sm:$0xff]
      %v848 = vld [vmem:[%s3 + $0x10] sm:$0xff]
      %v849 = vld [vmem:[%s3 + $0x18] sm:$0xff]
      %v850 = vld [vmem:[%s4] sm:$0x1]
      %v852 = vlaneseq
      %v853 = vshrl.u32 %v852, 7
      %v854 = vsub.s32 0, %v853
      %v855 = vrot.slane %v850, %v854
      %vm857 = vcmask 261120
      %v859 = vsel %vm857, %v843, 0
      %v862 = vsel %vm857, %v844, 0
      %v865 = vsel %vm857, %v845, 0
      %867 = vmatprep.subr.mxu0 0.0
      %868 = vmatpush1.msra.mxu0 %v846
      %869 = vmatprep.subr.mxu0 0.0
      %870 = vmatpush1.msra.mxu0 %v847
      %871 = vmatprep.subr.mxu0 0.0
      %872 = vmatpush1.msra.mxu0 %v848
      %873 = vmatprep.subr.mxu0 0.0
      %874 = vmatpush1.msra.mxu0 %v849
      %875 = vmatprep.subr.mxu0 0.0
      %876 = vmatpush1.msra.mxu0 0.0
      %877 = vmatprep.subr.mxu0 0.0
      %878 = vmatpush1.msra.mxu0 0.0
      %879 = vmatprep.subr.mxu0 0.0
      %880 = vmatpush1.msra.mxu0 0.0
      %881 = vmatprep.subr.mxu0 0.0
      %882 = vmatpush1.msra.mxu0 0.0
      %883 = vmatprep.subr.mxu0 0.0
      %884 = vmatpush1.msra.mxu0 0.0
      %885 = vmatprep.subr.mxu0 0.0
      %886 = vmatpush1.msra.mxu0 0.0
      %887 = vmatprep.subr.mxu0 0.0
      %888 = vmatpush1.msra.mxu0 0.0
      %889 = vmatprep.subr.mxu0 0.0
      %890 = vmatpush1.msra.mxu0 0.0
      %891 = vmatprep.subr.mxu0 0.0
      %892 = vmatpush1.msra.mxu0 0.0
      %893 = vmatprep.subr.mxu0 0.0
      %894 = vmatpush1.msra.mxu0 0.0
      %895 = vmatprep.subr.mxu0 0.0
      %896 = vmatpush1.msra.mxu0 0.0
      %897 = vmatprep.subr.mxu0 0.0
      %898 = vmatpush1.msra.mxu0 0.0
      %899 = vmatprep.subr.mxu0 0.0
      %900 = vmatpush1.msra.mxu0 0.0
      %901 = vmatprep.subr.mxu0 0.0
      %902 = vmatpush1.msra.mxu0 0.0
      %903 = vmatprep.subr.mxu0 0.0
      %904 = vmatpush1.msra.mxu0 0.0
      %905 = vmatprep.subr.mxu0 0.0
      %906 = vmatpush1.msra.mxu0 0.0
      %907 = vmatprep.subr.mxu0 0.0
      %908 = vmatpush1.msra.mxu0 0.0
      %909 = vmatprep.subr.mxu0 0.0
      %910 = vmatpush1.msra.mxu0 0.0
      %911 = vmatprep.subr.mxu0 0.0
      %912 = vmatpush1.msra.mxu0 0.0
      %913 = vmatprep.subr.mxu0 0.0
      %914 = vmatpush1.msra.mxu0 0.0
      %915 = vmatprep.subr.mxu0 0.0
      %916 = vmatpush1.msra.mxu0 0.0
      %917 = vmatprep.subr.mxu0 0.0
      %918 = vmatpush1.msra.mxu0 0.0
      %919 = vmatprep.subr.mxu0 0.0
      %920 = vmatpush1.msra.mxu0 0.0
      %921 = vmatprep.subr.mxu0 0.0
      %922 = vmatpush1.msra.mxu0 0.0
      %923 = vmatprep.subr.mxu0 0.0
      %924 = vmatpush1.msra.mxu0 0.0
      %925 = vmatprep.subr.mxu0 0.0
      %926 = vmatpush1.msra.mxu0 0.0
      %927 = vmatprep.subr.mxu0 0.0
      %928 = vmatpush1.msra.mxu0 0.0
      %929 = vmatprep.subr.mxu0 0.0
      %930 = vmatpush1.msra.mxu0 0.0
      %931 = vmatprep.mubr.f32.mxu0 0.0
      %932 = vmatmul.mubr.f32.gmra.mrb[0].mxu0 %v859
      %v933 = vpop.f32.mrb[0].mxu0
      %v934 = vadd.f32 %v855, %v933
      %v935 = vpop.f32.mrb[0].mxu0
      %936 = vmatprep.mubr.f32.mxu0 0.0
      %937 = vmatmul.mubr.f32.gmra.mrb[0].mxu0 %v862
      %v938 = vpop.f32.mrb[0].mxu0
      %v939 = vadd.f32 %v855, %v938
      %v940 = vpop.f32.mrb[0].mxu0
      %941 = vmatprep.mubr.f32.mxu0 0.0
      %942 = vmatmul.mubr.f32.gmra.mrb[0].mxu0 %v865
      %v943 = vpop.f32.mrb[0].mxu0
      %v944 = vadd.f32 %v855, %v943
      %v945 = vpop.f32.mrb[0].mxu0
      %946 = vdwg.mxu0
      %vm947 = vcmp.ne.f32.partialorder %v234, 0.0
      %vm948 = vcmp.ne.f32.partialorder %v235, 0.0
      %vm949 = vcmp.ne.f32.partialorder %v236, 0.0
      %v950 = vsel %vm947, 1, 0
      %v951 = vsel %vm948, 1, 0
      %v952 = vsel %vm949, 1, 0
      %v953 = vcvt.s32.f32 %v950
      %v954 = vcvt.s32.f32 %v951
      %v955 = vcvt.s32.f32 %v952
      %957 = vset.pattern.permute.xlu0 0
      %958 = vperm.xlu0 %957, %v953
      %v959 = vpop.permute.xlu0 %958
      %962 = vset.pattern.permute.xlu0 0
      %963 = vperm.xlu0 %962, %v954
      %v964 = vpop.permute.xlu0 %963
      %967 = vset.pattern.permute.xlu0 0
      %968 = vperm.xlu0 %967, %v955
      %v969 = vpop.permute.xlu0 %968
      %v971 = vmul.f32 %v934, %v959
      %v972 = vmul.f32 %v939, %v964
      %v973 = vmul.f32 %v944, %v969
      %974 = vst.msk [vmem:[%s226] sm:$0xff] %vm857, %v971
      %975 = vst.msk [vmem:[%s226 + $0x8] sm:$0xff] %vm857, %v972
      %976 = vst.msk [vmem:[%s226 + $0x10] sm:$0xff] %vm857, %v973
      %s977 = smul.u32 3, %s16
      %p978 = scmp.lt.s32.totalorder %s977, 8
      %s979 = scalar_select %p978, %s977, 8
      %s980 = smul.addr %s979, 8
      %s981 = scalar_lea.vmem %s5, %s980
      // Predicated region
      $region41: #{tpu_custom_call.1} parent=39 // pred_check
        %p982 = pneg %p144
      $region42: #{tpu_custom_call.1} parent=39 // pred_check_branch
        %984 = sbr.rel (%p982) target = $region44
      $region43: #{tpu_custom_call.1} parent=39 // pred_region
        %s985 = smul.u32 3, %s16
      $region44: #{tpu_custom_call.1} parent=39 // pred_fallthru
        _
    $region40: #{tpu_custom_call.1} parent=5 // pred_fallthru
      _
    %p986 = scmp.le.s32.totalorder 2, %s11
    // Predicated region
    $region45: #{tpu_custom_call.1} parent=5 // pred_check
      %p987 = pneg %p986
    $region46: #{tpu_custom_call.1} parent=5 // pred_check_branch
      %989 = sbr.rel (%p987) target = $region48
    $region47: #{tpu_custom_call.1} parent=5 // pred_region
      %s990 = ssub.s32 %s11, 2
      // Predicated region
      $region49: #{tpu_custom_call.1} parent=47 // pred_check
        %p991 = pneg %p150
      $region50: #{tpu_custom_call.1} parent=47 // pred_check_branch
        %993 = sbr.rel (%p991) target = $region52
      $region51: #{tpu_custom_call.1} parent=47 // pred_region
        %s994 = smul.u32 3, %s17
        %p995 = scmp.lt.s32.totalorder %s994, 8
        %s996 = scalar_select %p995, %s994, 8
        %s997 = smul.addr %s996, 8
        %s998 = scalar_lea.vmem %s5, %s997
      $region52: #{tpu_custom_call.1} parent=47 // pred_fallthru
        _
    $region48: #{tpu_custom_call.1} parent=5 // pred_fallthru
      _
  $region6: #{tpu_custom_call.1} parent=0 // loop_footer
    %s15 = sadd.s32 1, %s11
  $region7: #{tpu_custom_call.1} parent=0 // loop_footer_branch
    %10 = sbr.rel target = $region3
  $region8: #{tpu_custom_call.1} parent=0 // loop_exit
    _

</llo_original>
